<compile_context>
chip_gen: v7x
topology: tpu7x:2x2x1
jax: 0.10.0
libtpu: 0.0.40
codegen_flags: <defaults>
</compile_context>

<pallas_src>
import jax
import jax.numpy as jnp
from jax.experimental import pallas as pl
from jax.experimental.pallas import tpu as pltpu

LANE = 128


def _round_up(x, m):
    return (x + m - 1) // m * m


def mlp_kernel(idx_ref,                          # SMEM (B,) int32 (scalar prefetch)
               emb_hbm,                          # HBM (pl.ANY), (V, Dp) f32
               w1_ref, b1_ref, w2_ref, b2_ref,   # VMEM weight blocks
               out_ref,                          # VMEM (TB, Op) f32
               x_buf, copy_sem):                 # scratch: VMEM (TB, Dp) f32, DMA sems (TB,)
    i = pl.program_id(0)
    tb = x_buf.shape[0]

    # ---- embedding gather: one small DMA per row, driven by SMEM indices ----
    # TODO(synk): out-of-range token ids are not range-checked (nn.Embedding raises).
    copies = []
    for r in range(tb):                          # tb is small & static -> unrolled
        tok = idx_ref[i * tb + r]
        cp = pltpu.make_async_copy(emb_hbm.at[pl.ds(tok, 1), :],
                                   x_buf.at[pl.ds(r, 1), :],
                                   copy_sem.at[r])
        cp.start()
        copies.append(cp)
    for cp in copies:
        cp.wait()

    x = x_buf[...].astype(jnp.bfloat16)                                  # (TB, Dp)

    # ---- linear1 + sigmoid (bf16 MXU operands, f32 accumulate) -------------
    h = jnp.dot(x, w1_ref[...], preferred_element_type=jnp.float32)      # (TB, Hp)
    h = jax.nn.sigmoid(h + b1_ref[...])                                  # f32, EUP

    # ---- linear2 ------------------------------------------------------------
    o = jnp.dot(h.astype(jnp.bfloat16), w2_ref[...],
                preferred_element_type=jnp.float32) + b2_ref[...]        # (TB, Op)

    # ---- log_softmax over classes (padded classes carry -1e30 bias -> 0 mass)
    m = jnp.max(o, axis=-1, keepdims=True)
    s = o - m
    lse = jnp.log(jnp.sum(jnp.exp(s), axis=-1, keepdims=True))
    out_ref[...] = s - lse


def prepare_params(emb, w1, b1, w2, b2):
    """One-time parameter prep: pad to lane multiples, pre-transpose, cast to bf16.

    emb: (V, D); w1: (H, D); b1: (1, H); w2: (O, H); b2: (1, O)  (PyTorch layouts).
    Padding is constructed so it cannot change the forward result.
    """
    V, D = emb.shape
    H, _ = w1.shape
    O, _ = w2.shape
    Dp, Hp, Op = _round_up(D, LANE), _round_up(H, LANE), _round_up(O, LANE)

    emb_p = jnp.zeros((V, Dp), jnp.float32).at[:, :D].set(emb)
    w1t_p = jnp.zeros((Dp, Hp), jnp.bfloat16).at[:D, :H].set(w1.T.astype(jnp.bfloat16))
    b1_p = jnp.zeros((1, Hp), jnp.float32).at[:, :H].set(b1.reshape(1, H))
    w2t_p = jnp.zeros((Hp, Op), jnp.bfloat16).at[:H, :O].set(w2.T.astype(jnp.bfloat16))
    # Padded classes get a huge negative bias so they contribute exp(.) = 0.
    b2_p = jnp.full((1, Op), -1e30, jnp.float32).at[:, :O].set(b2.reshape(1, O))
    return dict(emb=emb_p, w1t=w1t_p, b1=b1_p, w2t=w2t_p, b2=b2_p, out_size=O)


def mlp_forward(indices, params, *, tb=8):
    """indices: (B,) int token ids. Returns (B, output_size) log-probs."""
    emb_p, w1t_p, b1_p, w2t_p, b2_p = (params["emb"], params["w1t"],
                                       params["b1"], params["w2t"], params["b2"])
    O = params["out_size"]

    B = indices.shape[0]
    assert B % tb == 0, "batch must be a multiple of the batch tile"
    Dp, Hp = w1t_p.shape
    Op = w2t_p.shape[1]
    idx = indices.astype(jnp.int32)

    out_padded = pl.pallas_call(
        mlp_kernel,
        out_shape=jax.ShapeDtypeStruct((B, Op), jnp.float32),
        grid_spec=pltpu.PrefetchScalarGridSpec(
            num_scalar_prefetch=1,                  # indices -> SMEM scalar path
            grid=(B // tb,),                        # batch tiles
            in_specs=[
                pl.BlockSpec(memory_space=pl.ANY),                # emb table stays in HBM
                pl.BlockSpec((Dp, Hp), lambda i, idx_r: (0, 0)),  # W1^T (padded, bf16)
                pl.BlockSpec((1, Hp),  lambda i, idx_r: (0, 0)),  # b1
                pl.BlockSpec((Hp, Op), lambda i, idx_r: (0, 0)),  # W2^T (padded, bf16)
                pl.BlockSpec((1, Op),  lambda i, idx_r: (0, 0)),  # b2 (pads = -1e30)
            ],
            out_specs=pl.BlockSpec((tb, Op), lambda i, idx_r: (i, 0)),
            scratch_shapes=[
                pltpu.VMEM((tb, Dp), jnp.float32),   # gathered embedding rows
                pltpu.SemaphoreType.DMA((tb,)),      # one DMA sem per gathered row
            ],
        ),
        compiler_params=pltpu.CompilerParams(
            dimension_semantics=("parallel",)),      # batch axis shardable on v7x
    )(idx, emb_p, w1t_p, b1_p, w2t_p, b2_p)

    return out_padded[:, :O]


if __name__ == "__main__":
    # Small shapes consistent with the module's constructor.
    V = 16
    input_size = 32
    hidden_size = 32
    output_size = 16
    B = 16                      # two batch tiles of 8 -> exercises the grid

    key = jax.random.PRNGKey(0)
    k_emb, k_idx, k_w1, k_w2 = jax.random.split(key, 4)

    # nn.Embedding default init ~ N(0, 1); linear weights/biases are explicitly
    # zeroed in the module's __init__.
    emb = jax.random.normal(k_emb, (V, input_size), dtype=jnp.float32)
    w1 = jnp.zeros((hidden_size, input_size), dtype=jnp.float32)
    b1 = jnp.zeros((1, hidden_size), dtype=jnp.float32)
    w2 = jnp.zeros((output_size, hidden_size), dtype=jnp.float32)
    b2 = jnp.zeros((1, output_size), dtype=jnp.float32)

    indices = jax.random.randint(k_idx, (B,), 0, V, dtype=jnp.int32)

    def ref_forward(idx, emb, w1, b1, w2, b2):
        x = emb[idx]
        h = jax.nn.sigmoid(x @ w1.T + b1)
        o = h @ w2.T + b2
        return jax.nn.log_softmax(o, axis=-1)

    # Module-spec run (all-zero linear weights -> uniform log-probs).
    params = prepare_params(emb, w1, b1, w2, b2)
    out = jax.block_until_ready(mlp_forward(indices, params))
    ref = ref_forward(indices, emb, w1, b1, w2, b2)
    assert out.shape == (B, output_size)
    assert jnp.allclose(out, ref, atol=2e-2), "zero-weight mismatch vs reference"

    # Secondary sanity check with non-zero weights to exercise the full math
    # path (bf16 MXU operands -> loosened tolerance vs f32 reference).
    w1r = 0.1 * jax.random.normal(k_w1, (hidden_size, input_size), jnp.float32)
    w2r = 0.1 * jax.random.normal(k_w2, (output_size, hidden_size), jnp.float32)
    params_r = prepare_params(emb, w1r, b1, w2r, b2)
    out_r = jax.block_until_ready(mlp_forward(indices, params_r))
    ref_r = ref_forward(indices, emb, w1r, b1, w2r, b2)
    assert jnp.allclose(out_r, ref_r, atol=2e-2), "random-weight mismatch vs reference"

    print("KERNEL_OK")
</pallas_src>

<mosaic_0001>
module attributes {stable_mosaic.version = 11 : i64} {
  func.func @mlp_kernel(%arg0: i32, %arg1: memref<16xi32, #tpu.memory_space<smem>>, %arg2: memref<16x128xf32, #tpu.memory_space<any>>, %arg3: memref<128x128xbf16, #tpu.memory_space<vmem>>, %arg4: memref<1x128xf32, #tpu.memory_space<vmem>>, %arg5: memref<128x128xbf16, #tpu.memory_space<vmem>>, %arg6: memref<1x128xf32, #tpu.memory_space<vmem>>, %arg7: memref<8x128xf32, #tpu.memory_space<vmem>>, %arg8: memref<8x128xf32, #tpu.memory_space<vmem>>, %arg9: memref<8x!tpu.dma_semaphore, #tpu.memory_space<semaphore_mem>>) attributes {dimension_semantics = [#tpu.dimension_semantics<parallel>], iteration_bounds = array<i64: 2>, scalar_prefetch = 1 : i64, scratch_operands = 2 : i64, tpu.core_type = #tpu.core_type<tc>, window_params = [{}, {pipeline_mode = #tpu.pipeline_mode<synchronous>, transform_indices = @transform_1, window_bounds = array<i64: 128, 128>}, {pipeline_mode = #tpu.pipeline_mode<synchronous>, transform_indices = @transform_2, window_bounds = array<i64: 1, 128>}, {pipeline_mode = #tpu.pipeline_mode<synchronous>, transform_indices = @transform_3, window_bounds = array<i64: 128, 128>}, {pipeline_mode = #tpu.pipeline_mode<synchronous>, transform_indices = @transform_4, window_bounds = array<i64: 1, 128>}, {transform_indices = @transform_5, window_bounds = array<i64: 8, 128>}]} {
    %c8_i32 = arith.constant 8 : i32
    %0 = arith.muli %arg0, %c8_i32 : i32
    %c0_i32 = arith.constant 0 : i32
    %1 = arith.addi %0, %c0_i32 : i32
    %2 = arith.index_cast %1 : i32 to index
    %3 = memref.load %arg1[%2] : memref<16xi32, #tpu.memory_space<smem>>
    %c0_i32_0 = arith.constant 0 : i32
    %c0_i32_1 = arith.constant 0 : i32
    %4 = tpu.memref_slice %arg2[%3, %c0_i32_1] : memref<16x128xf32, #tpu.memory_space<any>> -> memref<1x128xf32, #tpu.memory_space<any>>
    %c0_i32_2 = arith.constant 0 : i32
    %c0_i32_3 = arith.constant 0 : i32
    %5 = tpu.memref_slice %arg8[%c0_i32_2, %c0_i32_3] : memref<8x128xf32, #tpu.memory_space<vmem>> -> memref<1x128xf32, #tpu.memory_space<vmem>>
    %6 = tpu.memref_slice %arg9[%c0_i32_0] : memref<8x!tpu.dma_semaphore, #tpu.memory_space<semaphore_mem>> -> memref<1x!tpu.dma_semaphore, #tpu.memory_space<semaphore_mem>>
    %7 = tpu.memref_squeeze %6 : memref<1x!tpu.dma_semaphore, #tpu.memory_space<semaphore_mem>> -> memref<!tpu.dma_semaphore, #tpu.memory_space<semaphore_mem>>
    tpu.enqueue_dma source(%4 : memref<1x128xf32, #tpu.memory_space<any>>) target(%5 : memref<1x128xf32, #tpu.memory_space<vmem>>) target_semaphore(%7 : memref<!tpu.dma_semaphore, #tpu.memory_space<semaphore_mem>>)
    %c8_i32_4 = arith.constant 8 : i32
    %8 = arith.muli %arg0, %c8_i32_4 : i32
    %c1_i32 = arith.constant 1 : i32
    %9 = arith.addi %8, %c1_i32 : i32
    %10 = arith.index_cast %9 : i32 to index
    %11 = memref.load %arg1[%10] : memref<16xi32, #tpu.memory_space<smem>>
    %c1_i32_5 = arith.constant 1 : i32
    %c0_i32_6 = arith.constant 0 : i32
    %12 = tpu.memref_slice %arg2[%11, %c0_i32_6] : memref<16x128xf32, #tpu.memory_space<any>> -> memref<1x128xf32, #tpu.memory_space<any>>
    %c1_i32_7 = arith.constant 1 : i32
    %c0_i32_8 = arith.constant 0 : i32
    %13 = tpu.memref_slice %arg8[%c1_i32_7, %c0_i32_8] : memref<8x128xf32, #tpu.memory_space<vmem>> -> memref<1x128xf32, #tpu.memory_space<vmem>>
    %14 = tpu.memref_slice %arg9[%c1_i32_5] : memref<8x!tpu.dma_semaphore, #tpu.memory_space<semaphore_mem>> -> memref<1x!tpu.dma_semaphore, #tpu.memory_space<semaphore_mem>>
    %15 = tpu.memref_squeeze %14 : memref<1x!tpu.dma_semaphore, #tpu.memory_space<semaphore_mem>> -> memref<!tpu.dma_semaphore, #tpu.memory_space<semaphore_mem>>
    tpu.enqueue_dma source(%12 : memref<1x128xf32, #tpu.memory_space<any>>) target(%13 : memref<1x128xf32, #tpu.memory_space<vmem>>) target_semaphore(%15 : memref<!tpu.dma_semaphore, #tpu.memory_space<semaphore_mem>>)
    %c8_i32_9 = arith.constant 8 : i32
    %16 = arith.muli %arg0, %c8_i32_9 : i32
    %c2_i32 = arith.constant 2 : i32
    %17 = arith.addi %16, %c2_i32 : i32
    %18 = arith.index_cast %17 : i32 to index
    %19 = memref.load %arg1[%18] : memref<16xi32, #tpu.memory_space<smem>>
    %c2_i32_10 = arith.constant 2 : i32
    %c0_i32_11 = arith.constant 0 : i32
    %20 = tpu.memref_slice %arg2[%19, %c0_i32_11] : memref<16x128xf32, #tpu.memory_space<any>> -> memref<1x128xf32, #tpu.memory_space<any>>
    %c2_i32_12 = arith.constant 2 : i32
    %c0_i32_13 = arith.constant 0 : i32
    %21 = tpu.memref_slice %arg8[%c2_i32_12, %c0_i32_13] : memref<8x128xf32, #tpu.memory_space<vmem>> -> memref<1x128xf32, #tpu.memory_space<vmem>>
    %22 = tpu.memref_slice %arg9[%c2_i32_10] : memref<8x!tpu.dma_semaphore, #tpu.memory_space<semaphore_mem>> -> memref<1x!tpu.dma_semaphore, #tpu.memory_space<semaphore_mem>>
    %23 = tpu.memref_squeeze %22 : memref<1x!tpu.dma_semaphore, #tpu.memory_space<semaphore_mem>> -> memref<!tpu.dma_semaphore, #tpu.memory_space<semaphore_mem>>
    tpu.enqueue_dma source(%20 : memref<1x128xf32, #tpu.memory_space<any>>) target(%21 : memref<1x128xf32, #tpu.memory_space<vmem>>) target_semaphore(%23 : memref<!tpu.dma_semaphore, #tpu.memory_space<semaphore_mem>>)
    %c8_i32_14 = arith.constant 8 : i32
    %24 = arith.muli %arg0, %c8_i32_14 : i32
    %c3_i32 = arith.constant 3 : i32
    %25 = arith.addi %24, %c3_i32 : i32
    %26 = arith.index_cast %25 : i32 to index
    %27 = memref.load %arg1[%26] : memref<16xi32, #tpu.memory_space<smem>>
    %c3_i32_15 = arith.constant 3 : i32
    %c0_i32_16 = arith.constant 0 : i32
    %28 = tpu.memref_slice %arg2[%27, %c0_i32_16] : memref<16x128xf32, #tpu.memory_space<any>> -> memref<1x128xf32, #tpu.memory_space<any>>
    %c3_i32_17 = arith.constant 3 : i32
    %c0_i32_18 = arith.constant 0 : i32
    %29 = tpu.memref_slice %arg8[%c3_i32_17, %c0_i32_18] : memref<8x128xf32, #tpu.memory_space<vmem>> -> memref<1x128xf32, #tpu.memory_space<vmem>>
    %30 = tpu.memref_slice %arg9[%c3_i32_15] : memref<8x!tpu.dma_semaphore, #tpu.memory_space<semaphore_mem>> -> memref<1x!tpu.dma_semaphore, #tpu.memory_space<semaphore_mem>>
    %31 = tpu.memref_squeeze %30 : memref<1x!tpu.dma_semaphore, #tpu.memory_space<semaphore_mem>> -> memref<!tpu.dma_semaphore, #tpu.memory_space<semaphore_mem>>
    tpu.enqueue_dma source(%28 : memref<1x128xf32, #tpu.memory_space<any>>) target(%29 : memref<1x128xf32, #tpu.memory_space<vmem>>) target_semaphore(%31 : memref<!tpu.dma_semaphore, #tpu.memory_space<semaphore_mem>>)
    %c8_i32_19 = arith.constant 8 : i32
    %32 = arith.muli %arg0, %c8_i32_19 : i32
    %c4_i32 = arith.constant 4 : i32
    %33 = arith.addi %32, %c4_i32 : i32
    %34 = arith.index_cast %33 : i32 to index
    %35 = memref.load %arg1[%34] : memref<16xi32, #tpu.memory_space<smem>>
    %c4_i32_20 = arith.constant 4 : i32
    %c0_i32_21 = arith.constant 0 : i32
    %36 = tpu.memref_slice %arg2[%35, %c0_i32_21] : memref<16x128xf32, #tpu.memory_space<any>> -> memref<1x128xf32, #tpu.memory_space<any>>
    %c4_i32_22 = arith.constant 4 : i32
    %c0_i32_23 = arith.constant 0 : i32
    %37 = tpu.memref_slice %arg8[%c4_i32_22, %c0_i32_23] : memref<8x128xf32, #tpu.memory_space<vmem>> -> memref<1x128xf32, #tpu.memory_space<vmem>>
    %38 = tpu.memref_slice %arg9[%c4_i32_20] : memref<8x!tpu.dma_semaphore, #tpu.memory_space<semaphore_mem>> -> memref<1x!tpu.dma_semaphore, #tpu.memory_space<semaphore_mem>>
    %39 = tpu.memref_squeeze %38 : memref<1x!tpu.dma_semaphore, #tpu.memory_space<semaphore_mem>> -> memref<!tpu.dma_semaphore, #tpu.memory_space<semaphore_mem>>
    tpu.enqueue_dma source(%36 : memref<1x128xf32, #tpu.memory_space<any>>) target(%37 : memref<1x128xf32, #tpu.memory_space<vmem>>) target_semaphore(%39 : memref<!tpu.dma_semaphore, #tpu.memory_space<semaphore_mem>>)
    %c8_i32_24 = arith.constant 8 : i32
    %40 = arith.muli %arg0, %c8_i32_24 : i32
    %c5_i32 = arith.constant 5 : i32
    %41 = arith.addi %40, %c5_i32 : i32
    %42 = arith.index_cast %41 : i32 to index
    %43 = memref.load %arg1[%42] : memref<16xi32, #tpu.memory_space<smem>>
    %c5_i32_25 = arith.constant 5 : i32
    %c0_i32_26 = arith.constant 0 : i32
    %44 = tpu.memref_slice %arg2[%43, %c0_i32_26] : memref<16x128xf32, #tpu.memory_space<any>> -> memref<1x128xf32, #tpu.memory_space<any>>
    %c5_i32_27 = arith.constant 5 : i32
    %c0_i32_28 = arith.constant 0 : i32
    %45 = tpu.memref_slice %arg8[%c5_i32_27, %c0_i32_28] : memref<8x128xf32, #tpu.memory_space<vmem>> -> memref<1x128xf32, #tpu.memory_space<vmem>>
    %46 = tpu.memref_slice %arg9[%c5_i32_25] : memref<8x!tpu.dma_semaphore, #tpu.memory_space<semaphore_mem>> -> memref<1x!tpu.dma_semaphore, #tpu.memory_space<semaphore_mem>>
    %47 = tpu.memref_squeeze %46 : memref<1x!tpu.dma_semaphore, #tpu.memory_space<semaphore_mem>> -> memref<!tpu.dma_semaphore, #tpu.memory_space<semaphore_mem>>
    tpu.enqueue_dma source(%44 : memref<1x128xf32, #tpu.memory_space<any>>) target(%45 : memref<1x128xf32, #tpu.memory_space<vmem>>) target_semaphore(%47 : memref<!tpu.dma_semaphore, #tpu.memory_space<semaphore_mem>>)
    %c8_i32_29 = arith.constant 8 : i32
    %48 = arith.muli %arg0, %c8_i32_29 : i32
    %c6_i32 = arith.constant 6 : i32
    %49 = arith.addi %48, %c6_i32 : i32
    %50 = arith.index_cast %49 : i32 to index
    %51 = memref.load %arg1[%50] : memref<16xi32, #tpu.memory_space<smem>>
    %c6_i32_30 = arith.constant 6 : i32
    %c0_i32_31 = arith.constant 0 : i32
    %52 = tpu.memref_slice %arg2[%51, %c0_i32_31] : memref<16x128xf32, #tpu.memory_space<any>> -> memref<1x128xf32, #tpu.memory_space<any>>
    %c6_i32_32 = arith.constant 6 : i32
    %c0_i32_33 = arith.constant 0 : i32
    %53 = tpu.memref_slice %arg8[%c6_i32_32, %c0_i32_33] : memref<8x128xf32, #tpu.memory_space<vmem>> -> memref<1x128xf32, #tpu.memory_space<vmem>>
    %54 = tpu.memref_slice %arg9[%c6_i32_30] : memref<8x!tpu.dma_semaphore, #tpu.memory_space<semaphore_mem>> -> memref<1x!tpu.dma_semaphore, #tpu.memory_space<semaphore_mem>>
    %55 = tpu.memref_squeeze %54 : memref<1x!tpu.dma_semaphore, #tpu.memory_space<semaphore_mem>> -> memref<!tpu.dma_semaphore, #tpu.memory_space<semaphore_mem>>
    tpu.enqueue_dma source(%52 : memref<1x128xf32, #tpu.memory_space<any>>) target(%53 : memref<1x128xf32, #tpu.memory_space<vmem>>) target_semaphore(%55 : memref<!tpu.dma_semaphore, #tpu.memory_space<semaphore_mem>>)
    %c8_i32_34 = arith.constant 8 : i32
    %56 = arith.muli %arg0, %c8_i32_34 : i32
    %c7_i32 = arith.constant 7 : i32
    %57 = arith.addi %56, %c7_i32 : i32
    %58 = arith.index_cast %57 : i32 to index
    %59 = memref.load %arg1[%58] : memref<16xi32, #tpu.memory_space<smem>>
    %c7_i32_35 = arith.constant 7 : i32
    %c0_i32_36 = arith.constant 0 : i32
    %60 = tpu.memref_slice %arg2[%59, %c0_i32_36] : memref<16x128xf32, #tpu.memory_space<any>> -> memref<1x128xf32, #tpu.memory_space<any>>
    %c7_i32_37 = arith.constant 7 : i32
    %c0_i32_38 = arith.constant 0 : i32
    %61 = tpu.memref_slice %arg8[%c7_i32_37, %c0_i32_38] : memref<8x128xf32, #tpu.memory_space<vmem>> -> memref<1x128xf32, #tpu.memory_space<vmem>>
    %62 = tpu.memref_slice %arg9[%c7_i32_35] : memref<8x!tpu.dma_semaphore, #tpu.memory_space<semaphore_mem>> -> memref<1x!tpu.dma_semaphore, #tpu.memory_space<semaphore_mem>>
    %63 = tpu.memref_squeeze %62 : memref<1x!tpu.dma_semaphore, #tpu.memory_space<semaphore_mem>> -> memref<!tpu.dma_semaphore, #tpu.memory_space<semaphore_mem>>
    tpu.enqueue_dma source(%60 : memref<1x128xf32, #tpu.memory_space<any>>) target(%61 : memref<1x128xf32, #tpu.memory_space<vmem>>) target_semaphore(%63 : memref<!tpu.dma_semaphore, #tpu.memory_space<semaphore_mem>>)
    %c0_i32_39 = arith.constant 0 : i32
    %c0_i32_40 = arith.constant 0 : i32
    %64 = tpu.memref_slice %arg2[%3, %c0_i32_40] : memref<16x128xf32, #tpu.memory_space<any>> -> memref<1x128xf32, #tpu.memory_space<any>>
    %c0_i32_41 = arith.constant 0 : i32
    %c0_i32_42 = arith.constant 0 : i32
    %65 = tpu.memref_slice %arg8[%c0_i32_41, %c0_i32_42] : memref<8x128xf32, #tpu.memory_space<vmem>> -> memref<1x128xf32, #tpu.memory_space<vmem>>
    %66 = tpu.memref_slice %arg9[%c0_i32_39] : memref<8x!tpu.dma_semaphore, #tpu.memory_space<semaphore_mem>> -> memref<1x!tpu.dma_semaphore, #tpu.memory_space<semaphore_mem>>
    %67 = tpu.memref_squeeze %66 : memref<1x!tpu.dma_semaphore, #tpu.memory_space<semaphore_mem>> -> memref<!tpu.dma_semaphore, #tpu.memory_space<semaphore_mem>>
    tpu.wait_dma2 semaphore(%67 : memref<!tpu.dma_semaphore, #tpu.memory_space<semaphore_mem>>) src(%64 : memref<1x128xf32, #tpu.memory_space<any>>) dst(%65 : memref<1x128xf32, #tpu.memory_space<vmem>>)
    %c1_i32_43 = arith.constant 1 : i32
    %c0_i32_44 = arith.constant 0 : i32
    %68 = tpu.memref_slice %arg2[%11, %c0_i32_44] : memref<16x128xf32, #tpu.memory_space<any>> -> memref<1x128xf32, #tpu.memory_space<any>>
    %c1_i32_45 = arith.constant 1 : i32
    %c0_i32_46 = arith.constant 0 : i32
    %69 = tpu.memref_slice %arg8[%c1_i32_45, %c0_i32_46] : memref<8x128xf32, #tpu.memory_space<vmem>> -> memref<1x128xf32, #tpu.memory_space<vmem>>
    %70 = tpu.memref_slice %arg9[%c1_i32_43] : memref<8x!tpu.dma_semaphore, #tpu.memory_space<semaphore_mem>> -> memref<1x!tpu.dma_semaphore, #tpu.memory_space<semaphore_mem>>
    %71 = tpu.memref_squeeze %70 : memref<1x!tpu.dma_semaphore, #tpu.memory_space<semaphore_mem>> -> memref<!tpu.dma_semaphore, #tpu.memory_space<semaphore_mem>>
    tpu.wait_dma2 semaphore(%71 : memref<!tpu.dma_semaphore, #tpu.memory_space<semaphore_mem>>) src(%68 : memref<1x128xf32, #tpu.memory_space<any>>) dst(%69 : memref<1x128xf32, #tpu.memory_space<vmem>>)
    %c2_i32_47 = arith.constant 2 : i32
    %c0_i32_48 = arith.constant 0 : i32
    %72 = tpu.memref_slice %arg2[%19, %c0_i32_48] : memref<16x128xf32, #tpu.memory_space<any>> -> memref<1x128xf32, #tpu.memory_space<any>>
    %c2_i32_49 = arith.constant 2 : i32
    %c0_i32_50 = arith.constant 0 : i32
    %73 = tpu.memref_slice %arg8[%c2_i32_49, %c0_i32_50] : memref<8x128xf32, #tpu.memory_space<vmem>> -> memref<1x128xf32, #tpu.memory_space<vmem>>
    %74 = tpu.memref_slice %arg9[%c2_i32_47] : memref<8x!tpu.dma_semaphore, #tpu.memory_space<semaphore_mem>> -> memref<1x!tpu.dma_semaphore, #tpu.memory_space<semaphore_mem>>
    %75 = tpu.memref_squeeze %74 : memref<1x!tpu.dma_semaphore, #tpu.memory_space<semaphore_mem>> -> memref<!tpu.dma_semaphore, #tpu.memory_space<semaphore_mem>>
    tpu.wait_dma2 semaphore(%75 : memref<!tpu.dma_semaphore, #tpu.memory_space<semaphore_mem>>) src(%72 : memref<1x128xf32, #tpu.memory_space<any>>) dst(%73 : memref<1x128xf32, #tpu.memory_space<vmem>>)
    %c3_i32_51 = arith.constant 3 : i32
    %c0_i32_52 = arith.constant 0 : i32
    %76 = tpu.memref_slice %arg2[%27, %c0_i32_52] : memref<16x128xf32, #tpu.memory_space<any>> -> memref<1x128xf32, #tpu.memory_space<any>>
    %c3_i32_53 = arith.constant 3 : i32
    %c0_i32_54 = arith.constant 0 : i32
    %77 = tpu.memref_slice %arg8[%c3_i32_53, %c0_i32_54] : memref<8x128xf32, #tpu.memory_space<vmem>> -> memref<1x128xf32, #tpu.memory_space<vmem>>
    %78 = tpu.memref_slice %arg9[%c3_i32_51] : memref<8x!tpu.dma_semaphore, #tpu.memory_space<semaphore_mem>> -> memref<1x!tpu.dma_semaphore, #tpu.memory_space<semaphore_mem>>
    %79 = tpu.memref_squeeze %78 : memref<1x!tpu.dma_semaphore, #tpu.memory_space<semaphore_mem>> -> memref<!tpu.dma_semaphore, #tpu.memory_space<semaphore_mem>>
    tpu.wait_dma2 semaphore(%79 : memref<!tpu.dma_semaphore, #tpu.memory_space<semaphore_mem>>) src(%76 : memref<1x128xf32, #tpu.memory_space<any>>) dst(%77 : memref<1x128xf32, #tpu.memory_space<vmem>>)
    %c4_i32_55 = arith.constant 4 : i32
    %c0_i32_56 = arith.constant 0 : i32
    %80 = tpu.memref_slice %arg2[%35, %c0_i32_56] : memref<16x128xf32, #tpu.memory_space<any>> -> memref<1x128xf32, #tpu.memory_space<any>>
    %c4_i32_57 = arith.constant 4 : i32
    %c0_i32_58 = arith.constant 0 : i32
    %81 = tpu.memref_slice %arg8[%c4_i32_57, %c0_i32_58] : memref<8x128xf32, #tpu.memory_space<vmem>> -> memref<1x128xf32, #tpu.memory_space<vmem>>
    %82 = tpu.memref_slice %arg9[%c4_i32_55] : memref<8x!tpu.dma_semaphore, #tpu.memory_space<semaphore_mem>> -> memref<1x!tpu.dma_semaphore, #tpu.memory_space<semaphore_mem>>
    %83 = tpu.memref_squeeze %82 : memref<1x!tpu.dma_semaphore, #tpu.memory_space<semaphore_mem>> -> memref<!tpu.dma_semaphore, #tpu.memory_space<semaphore_mem>>
    tpu.wait_dma2 semaphore(%83 : memref<!tpu.dma_semaphore, #tpu.memory_space<semaphore_mem>>) src(%80 : memref<1x128xf32, #tpu.memory_space<any>>) dst(%81 : memref<1x128xf32, #tpu.memory_space<vmem>>)
    %c5_i32_59 = arith.constant 5 : i32
    %c0_i32_60 = arith.constant 0 : i32
    %84 = tpu.memref_slice %arg2[%43, %c0_i32_60] : memref<16x128xf32, #tpu.memory_space<any>> -> memref<1x128xf32, #tpu.memory_space<any>>
    %c5_i32_61 = arith.constant 5 : i32
    %c0_i32_62 = arith.constant 0 : i32
    %85 = tpu.memref_slice %arg8[%c5_i32_61, %c0_i32_62] : memref<8x128xf32, #tpu.memory_space<vmem>> -> memref<1x128xf32, #tpu.memory_space<vmem>>
    %86 = tpu.memref_slice %arg9[%c5_i32_59] : memref<8x!tpu.dma_semaphore, #tpu.memory_space<semaphore_mem>> -> memref<1x!tpu.dma_semaphore, #tpu.memory_space<semaphore_mem>>
    %87 = tpu.memref_squeeze %86 : memref<1x!tpu.dma_semaphore, #tpu.memory_space<semaphore_mem>> -> memref<!tpu.dma_semaphore, #tpu.memory_space<semaphore_mem>>
    tpu.wait_dma2 semaphore(%87 : memref<!tpu.dma_semaphore, #tpu.memory_space<semaphore_mem>>) src(%84 : memref<1x128xf32, #tpu.memory_space<any>>) dst(%85 : memref<1x128xf32, #tpu.memory_space<vmem>>)
    %c6_i32_63 = arith.constant 6 : i32
    %c0_i32_64 = arith.constant 0 : i32
    %88 = tpu.memref_slice %arg2[%51, %c0_i32_64] : memref<16x128xf32, #tpu.memory_space<any>> -> memref<1x128xf32, #tpu.memory_space<any>>
    %c6_i32_65 = arith.constant 6 : i32
    %c0_i32_66 = arith.constant 0 : i32
    %89 = tpu.memref_slice %arg8[%c6_i32_65, %c0_i32_66] : memref<8x128xf32, #tpu.memory_space<vmem>> -> memref<1x128xf32, #tpu.memory_space<vmem>>
    %90 = tpu.memref_slice %arg9[%c6_i32_63] : memref<8x!tpu.dma_semaphore, #tpu.memory_space<semaphore_mem>> -> memref<1x!tpu.dma_semaphore, #tpu.memory_space<semaphore_mem>>
    %91 = tpu.memref_squeeze %90 : memref<1x!tpu.dma_semaphore, #tpu.memory_space<semaphore_mem>> -> memref<!tpu.dma_semaphore, #tpu.memory_space<semaphore_mem>>
    tpu.wait_dma2 semaphore(%91 : memref<!tpu.dma_semaphore, #tpu.memory_space<semaphore_mem>>) src(%88 : memref<1x128xf32, #tpu.memory_space<any>>) dst(%89 : memref<1x128xf32, #tpu.memory_space<vmem>>)
    %c7_i32_67 = arith.constant 7 : i32
    %c0_i32_68 = arith.constant 0 : i32
    %92 = tpu.memref_slice %arg2[%59, %c0_i32_68] : memref<16x128xf32, #tpu.memory_space<any>> -> memref<1x128xf32, #tpu.memory_space<any>>
    %c7_i32_69 = arith.constant 7 : i32
    %c0_i32_70 = arith.constant 0 : i32
    %93 = tpu.memref_slice %arg8[%c7_i32_69, %c0_i32_70] : memref<8x128xf32, #tpu.memory_space<vmem>> -> memref<1x128xf32, #tpu.memory_space<vmem>>
    %94 = tpu.memref_slice %arg9[%c7_i32_67] : memref<8x!tpu.dma_semaphore, #tpu.memory_space<semaphore_mem>> -> memref<1x!tpu.dma_semaphore, #tpu.memory_space<semaphore_mem>>
    %95 = tpu.memref_squeeze %94 : memref<1x!tpu.dma_semaphore, #tpu.memory_space<semaphore_mem>> -> memref<!tpu.dma_semaphore, #tpu.memory_space<semaphore_mem>>
    tpu.wait_dma2 semaphore(%95 : memref<!tpu.dma_semaphore, #tpu.memory_space<semaphore_mem>>) src(%92 : memref<1x128xf32, #tpu.memory_space<any>>) dst(%93 : memref<1x128xf32, #tpu.memory_space<vmem>>)
    %c0 = arith.constant 0 : index
    %c0_71 = arith.constant 0 : index
    %96 = vector.load %arg8[%c0, %c0_71] : memref<8x128xf32, #tpu.memory_space<vmem>>, vector<8x128xf32>
    %97 = arith.truncf %96 : vector<8x128xf32> to vector<8x128xbf16>
    %c0_72 = arith.constant 0 : index
    %c0_73 = arith.constant 0 : index
    %98 = vector.load %arg3[%c0_72, %c0_73] : memref<128x128xbf16, #tpu.memory_space<vmem>>, vector<128x128xbf16>
    %cst = arith.constant dense<0.000000e+00> : vector<8x128xf32>
    %99 = tpu.matmul %97, %98, %cst {dimension_numbers = #tpu.dot_dimension_numbers<[1], [0], [0], [1], [0, 0, 1, 1], [], []>} : vector<8x128xbf16>, vector<128x128xbf16>, vector<8x128xf32> -> vector<8x128xf32>
    %c0_74 = arith.constant 0 : index
    %c0_75 = arith.constant 0 : index
    %100 = vector.load %arg4[%c0_74, %c0_75] : memref<1x128xf32, #tpu.memory_space<vmem>>, vector<1x128xf32>
    %101 = vector.broadcast %100 : vector<1x128xf32> to vector<8x128xf32>
    %102 = arith.addf %99, %101 : vector<8x128xf32>
    %103 = arith.negf %102 : vector<8x128xf32>
    %104 = math.exp %103 : vector<8x128xf32>
    %cst_76 = arith.constant 1.000000e+00 : f32
    %105 = vector.broadcast %cst_76 : f32 to vector<8x128xf32>
    %106 = arith.addf %105, %104 : vector<8x128xf32>
    %107 = arith.divf %105, %106 : vector<8x128xf32>
    %108 = arith.truncf %107 : vector<8x128xf32> to vector<8x128xbf16>
    %c0_77 = arith.constant 0 : index
    %c0_78 = arith.constant 0 : index
    %109 = vector.load %arg5[%c0_77, %c0_78] : memref<128x128xbf16, #tpu.memory_space<vmem>>, vector<128x128xbf16>
    %cst_79 = arith.constant dense<0.000000e+00> : vector<8x128xf32>
    %110 = tpu.matmul %108, %109, %cst_79 {dimension_numbers = #tpu.dot_dimension_numbers<[1], [0], [0], [1], [0, 0, 1, 1], [], []>} : vector<8x128xbf16>, vector<128x128xbf16>, vector<8x128xf32> -> vector<8x128xf32>
    %c0_80 = arith.constant 0 : index
    %c0_81 = arith.constant 0 : index
    %111 = vector.load %arg6[%c0_80, %c0_81] : memref<1x128xf32, #tpu.memory_space<vmem>>, vector<1x128xf32>
    %112 = vector.broadcast %111 : vector<1x128xf32> to vector<8x128xf32>
    %113 = arith.addf %110, %112 : vector<8x128xf32>
    %cst_82 = arith.constant dense<0xFF800000> : vector<8xf32>
    %114 = vector.multi_reduction <maximumf>, %113, %cst_82 [1] : vector<8x128xf32> to vector<8xf32>
    %115 = vector.shape_cast %114 : vector<8xf32> to vector<8x1xf32>
    %116 = vector.broadcast %115 : vector<8x1xf32> to vector<8x128xf32>
    %117 = arith.subf %113, %116 : vector<8x128xf32>
    %118 = math.exp %117 : vector<8x128xf32>
    %cst_83 = arith.constant dense<0.000000e+00> : vector<8xf32>
    %119 = vector.multi_reduction <add>, %118, %cst_83 [1] : vector<8x128xf32> to vector<8xf32>
    %120 = vector.shape_cast %119 : vector<8xf32> to vector<8x1xf32>
    %121 = math.log %120 : vector<8x1xf32>
    %122 = vector.broadcast %121 : vector<8x1xf32> to vector<8x128xf32>
    %123 = arith.subf %117, %122 : vector<8x128xf32>
    %c0_84 = arith.constant 0 : index
    %c0_85 = arith.constant 0 : index
    %124 = vector.load %arg7[%c0_84, %c0_85] : memref<8x128xf32, #tpu.memory_space<vmem>>, vector<8x128xf32>
    tpu.vector_store %arg7[%c0_84, %c0_85], %123 {strides = array<i32>} : memref<8x128xf32, #tpu.memory_space<vmem>>, vector<8x128xf32>,
    return
  }
  func.func @transform_1(%arg0: i32, %arg1: memref<16xi32, #tpu.memory_space<smem>>) -> (i32, i32) {
    %c0_i32 = arith.constant 0 : i32
    %c0_i32_0 = arith.constant 0 : i32
    %c0_i32_1 = arith.constant 0 : i32
    return %c0_i32, %c0_i32_0 : i32, i32
  }
  func.func @transform_2(%arg0: i32, %arg1: memref<16xi32, #tpu.memory_space<smem>>) -> (i32, i32) {
    %c0_i32 = arith.constant 0 : i32
    %c0_i32_0 = arith.constant 0 : i32
    %c0_i32_1 = arith.constant 0 : i32
    return %c0_i32, %c0_i32_0 : i32, i32
  }
  func.func @transform_3(%arg0: i32, %arg1: memref<16xi32, #tpu.memory_space<smem>>) -> (i32, i32) {
    %c0_i32 = arith.constant 0 : i32
    %c0_i32_0 = arith.constant 0 : i32
    %c0_i32_1 = arith.constant 0 : i32
    return %c0_i32, %c0_i32_0 : i32, i32
  }
  func.func @transform_4(%arg0: i32, %arg1: memref<16xi32, #tpu.memory_space<smem>>) -> (i32, i32) {
    %c0_i32 = arith.constant 0 : i32
    %c0_i32_0 = arith.constant 0 : i32
    %c0_i32_1 = arith.constant 0 : i32
    return %c0_i32, %c0_i32_0 : i32, i32
  }
  func.func @transform_5(%arg0: i32, %arg1: memref<16xi32, #tpu.memory_space<smem>>) -> (i32, i32) {
    %c0_i32 = arith.constant 0 : i32
    %c0_i32_0 = arith.constant 0 : i32
    return %arg0, %c0_i32 : i32, i32
  }
}

</mosaic_0001>

<llo_original>
// kernel: tpu_custom_call.1
$region0: #{tpu_custom_call.1}
  #allocation0 [shape = 'u32[]', space=smem, size = 0x4, offset = 0x4, fixed_abs, tag = 'smem constant byte address 0x4 - core index']
  #allocation1 [shape = 'u32[144,128]{1,0:T(1,128)}', space=vmem, size = 0x12000, scoped, tag = 'internal scratch']
  #allocation2 [shape = 'f32[8,128]{1,0:T(8,128)}', space=vmem, size = 0x1000, scoped, tag = 'scratch operand']
  #allocation3 [shape = 's32[8]{0}', space=sflag, size = 0x20, scoped, tag = 'scratch operand']
  #allocation4 [shape = 's32[1]{0}', space=sflag, size = 0x4, scoped, tag = 'scoped memory for tpu_custom_call.1']
  #allocation5 [shape = 'u8[512]{0}', space=smem, size = 0x200, scoped, tag = 'prefetched SMEM operand 0']
  #allocation12 [shape = 's32[]', space=sflag, size = 0x4, offset = 0, fixed_abs, tag = 'sflag constant byte address 0x0 - dummy sync flag']
  #allocation13 [shape = 's32[]', space=sflag, size = 0x4, offset = 0, fixed_abs, tag = 'sflag constant byte address 0x0 - dummy sync flag']
  #allocation14 [shape = 'u32[]', space=smem, size = 0x4, offset = 0x44, fixed_abs, tag = 'smem constant byte address 0x44 - assertion arg 0']
  #allocation15 [shape = 'u32[]', space=smem, size = 0x4, offset = 0x48, fixed_abs, tag = 'smem constant byte address 0x48 - assertion arg 1']
  #allocation16 [shape = 's32[]', space=sflag, size = 0x4, offset = 0, fixed_abs, tag = 'sflag constant byte address 0x0 - dummy sync flag']
  #allocation17 [shape = 's32[]', space=sflag, size = 0x4, offset = 0, fixed_abs, tag = 'sflag constant byte address 0x0 - dummy sync flag']
  #allocation18 [shape = 's32[]', space=sflag, size = 0x4, offset = 0, fixed_abs, tag = 'sflag constant byte address 0x0 - dummy sync flag']
  #allocation19 [shape = 's32[]', space=sflag, size = 0x4, offset = 0, fixed_abs, tag = 'sflag constant byte address 0x0 - dummy sync flag']
  #allocation20 [shape = 's32[]', space=sflag, size = 0x4, offset = 0, fixed_abs, tag = 'sflag constant byte address 0x0 - dummy sync flag']
  #allocation21 [shape = 's32[]', space=sflag, size = 0x4, offset = 0, fixed_abs, tag = 'sflag constant byte address 0x0 - dummy sync flag']
  #allocation22 [shape = 's32[]', space=sflag, size = 0x4, offset = 0, fixed_abs, tag = 'sflag constant byte address 0x0 - dummy sync flag']
  #allocation23 [shape = 's32[]', space=sflag, size = 0x4, offset = 0, fixed_abs, tag = 'sflag constant byte address 0x0 - dummy sync flag']
  #allocation24 [shape = 's32[]', space=sflag, size = 0x4, offset = 0, fixed_abs, tag = 'sflag constant byte address 0x0 - dummy sync flag']
  #allocation25 [shape = 's32[]', space=sflag, size = 0x4, offset = 0, fixed_abs, tag = 'sflag constant byte address 0x0 - dummy sync flag']
  #allocation26 [shape = 's32[]', space=sflag, size = 0x4, offset = 0, fixed_abs, tag = 'sflag constant byte address 0x0 - dummy sync flag']
  #allocation27 [shape = 's32[]', space=sflag, size = 0x4, offset = 0, fixed_abs, tag = 'sflag constant byte address 0x0 - dummy sync flag']
  #allocation28 [shape = 's32[]', space=sflag, size = 0x4, offset = 0, fixed_abs, tag = 'sflag constant byte address 0x0 - dummy sync flag']
  #allocation29 [shape = 's32[]', space=sflag, size = 0x4, offset = 0, fixed_abs, tag = 'sflag constant byte address 0x0 - dummy sync flag']
  %s0 = inlined_call_operand.hbm [shape: s32[16], index: 0, kind: input, shape index: {}]
  %s1 = inlined_call_operand.hbm [shape: f32[16,128], index: 1, kind: input, shape index: {}]
  %s2 = inlined_call_operand.hbm [shape: bf16[128,128], index: 2, kind: input, shape index: {}]
  %s3 = inlined_call_operand.vmem [shape: f32[1,128], index: 3, kind: input, shape index: {}]
  %s4 = inlined_call_operand.hbm [shape: bf16[128,128], index: 4, kind: input, shape index: {}]
  %s5 = inlined_call_operand.vmem [shape: f32[1,128], index: 5, kind: input, shape index: {}]
  %s6 = inlined_call_operand.hbm [shape: f32[16,128], index: 6, kind: output, shape index: {}]
  %s7 = sld [smem:[#allocation0]]
  $region89: #{tpu_custom_call.1} parent=0
    _
  %s9 = ssub.s32 1, %s7
  %s10 = scalar_select 0, %s9, %s7
  %12 = dma.hbm_to_smem %s0, 16, [#allocation5], [#allocation4]
  %13 = dma.done [#allocation4], 16
  %14 = sfence
  $region1: #{tpu_custom_call.1} parent=0
    #allocation6 [shape = 'u8[32768]{0}', space=vmem, size = 0x8000, scoped, tag = 'input window, operand 2, single buffered']
    #allocation7 [shape = 's32[2]{0}', space=sflag, size = 0x8, scoped, tag = 'scoped memory for tpu_custom_call.1']
    #allocation8 [shape = 's32[2]{0}', space=sflag, size = 0x8, scoped, tag = 'scoped memory for tpu_custom_call.1']
    #allocation9 [shape = 'u8[32768]{0}', space=vmem, size = 0x8000, scoped, tag = 'input window, operand 4, single buffered']
    #allocation10 [shape = 's32[1]{0}', space=sflag, size = 0x4, scoped, tag = 'scoped memory for tpu_custom_call.1']
    #allocation11 [shape = 'u8[8192]{0}', space=vmem, size = 0x2000, scoped, tag = 'output window, operand 0']
    %15 = vsyncpa [#allocation7], 0
    %16 = vsyncpa [#allocation10], 0
    %17 = vsyncpa [#allocation8], 0
    %s18 = scalar_lea.sflag [#allocation8], 1
    %19 = vsyncpa %s18, 0
    loop: start=0, step=1, limit=4
    $region2: #{tpu_custom_call.1} parent=1 // loop_pre_header
      _
    $region3: #{tpu_custom_call.1} parent=1 // loop_header
      %s21 = sphi 0, %s25
      %p22 = scmp.ge.s32.totalorder %s21, 4
      %s29 = sphi 0, %s29
      %s31 = sphi 0, %s29
      %s32 = sphi 0, %s31
      %s46 = sphi 0, %s32
      %s50 = sphi 0, %s50
      %s52 = sphi 0, %s50
      %s53 = sphi 0, %s52
      %s67 = sphi 0, %s53
      %s71 = sphi 0, %s71
      %s73 = sphi 0, %s71
      %s74 = sphi 0, %s73
      %s88 = sphi 0, %s74
      %s92 = sphi 0, %s92
      %s94 = sphi 0, %s92
      %s95 = sphi 0, %s94
      %s109 = sphi 0, %s95
      %s115 = sphi 0, %s117
      %s118 = sphi 0, %s115
      %s119 = sphi 0, %s118
      %s135 = sphi 0, %s119
    $region4: #{tpu_custom_call.1} parent=1 // loop_header_branch
      %24 = sbr.rel (%p22) target = $region8
    $region5: #{tpu_custom_call.1} parent=1 // loop_body
      %s26 = ssub.s32 %s21, 1
      %s27 = ssub.s32 %s21, 2
      %s28 = sadd.s32 %s21, 1
      %s30 = sadd.s32 %s29, 1
      %p33 = scmp.eq.s32.totalorder %s21, 1
      %p34 = scmp.ne.s32.totalorder %s29, %s31
      %p35 = scmp.eq.s32.totalorder %s21, 0
      %p36 = por %p34, %p35
      %p37 = scmp.ne.s32.totalorder %s29, %s31
      %p38 = scmp.eq.s32.totalorder %s26, 1
      %p39 = por %p37, %p38
      %p40 = scmp.ne.s32.totalorder %s31, %s32
      %p41 = scmp.eq.s32.totalorder %s26, 0
      %p42 = por %p40, %p41
      %p43 = scmp.ne.s32.totalorder %s31, %s32
      %p44 = scmp.eq.s32.totalorder %s27, 1
      %p45 = por %p43, %p44
      %p47 = scmp.ne.s32.totalorder %s32, %s46
      %p48 = scmp.eq.s32.totalorder %s27, 0
      %p49 = por %p47, %p48
      %s51 = sadd.s32 %s50, 1
      %p54 = scmp.eq.s32.totalorder %s21, 1
      %p55 = scmp.ne.s32.totalorder %s50, %s52
      %p56 = scmp.eq.s32.totalorder %s21, 0
      %p57 = por %p55, %p56
      %p58 = scmp.ne.s32.totalorder %s50, %s52
      %p59 = scmp.eq.s32.totalorder %s26, 1
      %p60 = por %p58, %p59
      %p61 = scmp.ne.s32.totalorder %s52, %s53
      %p62 = scmp.eq.s32.totalorder %s26, 0
      %p63 = por %p61, %p62
      %p64 = scmp.ne.s32.totalorder %s52, %s53
      %p65 = scmp.eq.s32.totalorder %s27, 1
      %p66 = por %p64, %p65
      %p68 = scmp.ne.s32.totalorder %s53, %s67
      %p69 = scmp.eq.s32.totalorder %s27, 0
      %p70 = por %p68, %p69
      %s72 = sadd.s32 %s71, 1
      %p75 = scmp.eq.s32.totalorder %s21, 1
      %p76 = scmp.ne.s32.totalorder %s71, %s73
      %p77 = scmp.eq.s32.totalorder %s21, 0
      %p78 = por %p76, %p77
      %p79 = scmp.ne.s32.totalorder %s71, %s73
      %p80 = scmp.eq.s32.totalorder %s26, 1
      %p81 = por %p79, %p80
      %p82 = scmp.ne.s32.totalorder %s73, %s74
      %p83 = scmp.eq.s32.totalorder %s26, 0
      %p84 = por %p82, %p83
      %p85 = scmp.ne.s32.totalorder %s73, %s74
      %p86 = scmp.eq.s32.totalorder %s27, 1
      %p87 = por %p85, %p86
      %p89 = scmp.ne.s32.totalorder %s74, %s88
      %p90 = scmp.eq.s32.totalorder %s27, 0
      %p91 = por %p89, %p90
      %s93 = sadd.s32 %s92, 1
      %p96 = scmp.eq.s32.totalorder %s21, 1
      %p97 = scmp.ne.s32.totalorder %s92, %s94
      %p98 = scmp.eq.s32.totalorder %s21, 0
      %p99 = por %p97, %p98
      %p100 = scmp.ne.s32.totalorder %s92, %s94
      %p101 = scmp.eq.s32.totalorder %s26, 1
      %p102 = por %p100, %p101
      %p103 = scmp.ne.s32.totalorder %s94, %s95
      %p104 = scmp.eq.s32.totalorder %s26, 0
      %p105 = por %p103, %p104
      %p106 = scmp.ne.s32.totalorder %s94, %s95
      %p107 = scmp.eq.s32.totalorder %s27, 1
      %p108 = por %p106, %p107
      %p110 = scmp.ne.s32.totalorder %s95, %s109
      %p111 = scmp.eq.s32.totalorder %s27, 0
      %p112 = por %p110, %p111
      %s113 = ssub.s32 %s21, %s28
      %p114 = scmp.eq.s32.totalorder %s113, 0
      %s116 = sadd.s32 %s115, 1
      %s117 = scalar_select %p114, %s115, %s116
      %p120 = pneg %p114
      %p121 = scmp.eq.s32.totalorder %s21, 1
      %p122 = por %p120, %p121
      %p123 = scmp.ne.s32.totalorder %s115, %s118
      %p124 = scmp.eq.s32.totalorder %s21, 0
      %p125 = por %p123, %p124
      %p126 = scmp.ne.s32.totalorder %s115, %s118
      %p127 = scmp.eq.s32.totalorder %s26, 1
      %p128 = por %p126, %p127
      %p129 = scmp.ne.s32.totalorder %s118, %s119
      %p130 = scmp.eq.s32.totalorder %s26, 0
      %p131 = por %p129, %p130
      %p132 = scmp.ne.s32.totalorder %s118, %s119
      %p133 = scmp.eq.s32.totalorder %s27, 1
      %p134 = por %p132, %p133
      %p136 = scmp.ne.s32.totalorder %s119, %s135
      %p137 = scmp.eq.s32.totalorder %s27, 0
      %p138 = por %p136, %p137
      %p139 = scmp.le.s32.totalorder 1, %s21
      %p140 = scmp.lt.s32.totalorder %s21, 3
      %p141 = pnand %p139, %p140
      %p142 = pneg %p141
      // Predicated region
      $region9: #{tpu_custom_call.1} parent=5 // pred_check
        _
      $region10: #{tpu_custom_call.1} parent=5 // pred_check_branch
        %144 = sbr.rel (%p141) target = $region12
      $region11: #{tpu_custom_call.1} parent=5 // pred_region
        %s145 = ssub.s32 %s21, 1
        // Predicated region
        $region13: #{tpu_custom_call.1} parent=11 // pred_check
          %p146 = pneg %p42
        $region14: #{tpu_custom_call.1} parent=11 // pred_check_branch
          %148 = sbr.rel (%p146) target = $region16
        $region15: #{tpu_custom_call.1} parent=11 // pred_region
          %s150 = ssub.s32 1024, 1024
          %151 = vsyncadd [#allocation7], %s150
          %s152 = sshll.u32 [#allocation6], 4
          %s153 = int_to_ptr.vmem [resolvable:$true] %s152
          %158 = dma.hbm_to_vmem [thread:$0]  %s2, 1024, %s153, [#allocation7], 64, 64, 4
        $region16: #{tpu_custom_call.1} parent=11 // pred_fallthru
          _
        // Predicated region
        $region17: #{tpu_custom_call.1} parent=11 // pred_check
          %p159 = pneg %p63
        $region18: #{tpu_custom_call.1} parent=11 // pred_check_branch
          %161 = sbr.rel (%p159) target = $region20
        $region19: #{tpu_custom_call.1} parent=11 // pred_region
          _
        $region20: #{tpu_custom_call.1} parent=11 // pred_fallthru
          _
        // Predicated region
        $region21: #{tpu_custom_call.1} parent=11 // pred_check
          %p162 = pneg %p84
        $region22: #{tpu_custom_call.1} parent=11 // pred_check_branch
          %164 = sbr.rel (%p162) target = $region24
        $region23: #{tpu_custom_call.1} parent=11 // pred_region
          %s166 = ssub.s32 1024, 1024
          %167 = vsyncadd [#allocation10], %s166
          %s168 = sshll.u32 [#allocation9], 4
          %s169 = int_to_ptr.vmem [resolvable:$true] %s168
          %174 = dma.hbm_to_vmem [thread:$0]  %s4, 1024, %s169, [#allocation10], 64, 64, 4
        $region24: #{tpu_custom_call.1} parent=11 // pred_fallthru
          _
        // Predicated region
        $region25: #{tpu_custom_call.1} parent=11 // pred_check
          %p175 = pneg %p105
        $region26: #{tpu_custom_call.1} parent=11 // pred_check_branch
          %177 = sbr.rel (%p175) target = $region28
        $region27: #{tpu_custom_call.1} parent=11 // pred_region
          _
        $region28: #{tpu_custom_call.1} parent=11 // pred_fallthru
          _
      $region12: #{tpu_custom_call.1} parent=5 // pred_fallthru
        _
      %p178 = scmp.lt.s32.totalorder %s21, 2
      // Predicated region
      $region29: #{tpu_custom_call.1} parent=5 // pred_check
        %p179 = pneg %p178
      $region30: #{tpu_custom_call.1} parent=5 // pred_check_branch
        %181 = sbr.rel (%p179) target = $region32
      $region31: #{tpu_custom_call.1} parent=5 // pred_region
        _
      $region32: #{tpu_custom_call.1} parent=5 // pred_fallthru
        _
      %p182 = scmp.le.s32.totalorder 1, %s21
      %p183 = scmp.lt.s32.totalorder %s21, 3
      %p184 = pnand %p182, %p183
      %p185 = pneg %p184
      // Predicated region
      $region33: #{tpu_custom_call.1} parent=5 // pred_check
        _
      $region34: #{tpu_custom_call.1} parent=5 // pred_check_branch
        %187 = sbr.rel (%p184) target = $region36
      $region35: #{tpu_custom_call.1} parent=5 // pred_region
        %s188 = ssub.s32 %s21, 1
        // Predicated region
        $region37: #{tpu_custom_call.1} parent=35 // pred_check
          %p189 = pneg %p42
        $region38: #{tpu_custom_call.1} parent=35 // pred_check_branch
          %191 = sbr.rel (%p189) target = $region40
        $region39: #{tpu_custom_call.1} parent=35 // pred_region
          %192 = dma.done [#allocation7], 1024
        $region40: #{tpu_custom_call.1} parent=35 // pred_fallthru
          _
        // Predicated region
        $region41: #{tpu_custom_call.1} parent=35 // pred_check
          %p193 = pneg %p84
        $region42: #{tpu_custom_call.1} parent=35 // pred_check_branch
          %195 = sbr.rel (%p193) target = $region44
        $region43: #{tpu_custom_call.1} parent=35 // pred_region
          %196 = dma.done [#allocation10], 1024
        $region44: #{tpu_custom_call.1} parent=35 // pred_fallthru
          _
        %p197 = pneg %p42
        %p198 = pneg %p39
        %p199 = pneg %p63
        %p200 = pneg %p60
        %p201 = pneg %p84
        %p202 = pneg %p81
        %p203 = pneg %p105
        %p204 = pneg %p102
        %p205 = pneg %p131
        %p206 = pneg %p128
        %s207 = sand.u32 %s118, 1
        %s208 = scalar_lea.sflag [#allocation8], %s207
        %s209 = sand.u32 %s118, 1
        %s210 = smul.addr %s209, 8
        %s211 = scalar_lea.vmem [#allocation11], %s210
        %s213 = smul.u32 %s26, 8
        %s214 = sld [smem:[#allocation5 + %s213]]
        %s215 = smul.addr %s214, 16
        %s216 = scalar_lea.hbm %s1, %s215
        // Predicated region
        $region45: #{tpu_custom_call.1} parent=35 // pred_check
          _
        $region46: #{tpu_custom_call.1} parent=35 // pred_check_branch
          %218 = sbr.rel target = $region48
        $region47: #{tpu_custom_call.1} parent=35 // pred_region
          %219 = sst [smem:[#allocation14]] [#allocation13]
          %220 = sst [smem:[#allocation15]] [#allocation12]
        $region48: #{tpu_custom_call.1} parent=35 // pred_fallthru
          _
        %222 = shalt.err (0)
        %s224 = sshll.u32 [#allocation2], 4
        %s225 = int_to_ptr.vmem [resolvable:$true] %s224
        %227 = dma.hbm_to_vmem [thread:$0]  %s216, 16, %s225, [#allocation3]
        %s228 = sadd.s32 %s213, 1
        %s229 = sld [smem:[#allocation5 + %s228]]
        %s230 = smul.addr %s229, 16
        %s231 = scalar_lea.hbm %s1, %s230
        %s232 = scalar_lea.vmem [#allocation2], 1
        %s233 = scalar_lea.sflag [#allocation3], 1
        // Predicated region
        $region49: #{tpu_custom_call.1} parent=35 // pred_check
          _
        $region50: #{tpu_custom_call.1} parent=35 // pred_check_branch
          %235 = sbr.rel target = $region52
        $region51: #{tpu_custom_call.1} parent=35 // pred_region
          %236 = sst [smem:[#allocation14]] [#allocation17]
          %237 = sst [smem:[#allocation15]] [#allocation16]
        $region52: #{tpu_custom_call.1} parent=35 // pred_fallthru
          _
        %239 = shalt.err (0)
        %s241 = sshll.u32 %s232, 4
        %s242 = int_to_ptr.vmem [resolvable:$true] %s241
        %244 = dma.hbm_to_vmem [thread:$0]  %s231, 16, %s242, %s233
        %s245 = sadd.s32 %s213, 2
        %s246 = sld [smem:[#allocation5 + %s245]]
        %s247 = smul.addr %s246, 16
        %s248 = scalar_lea.hbm %s1, %s247
        %s249 = scalar_lea.vmem [#allocation2], 2
        %s250 = scalar_lea.sflag [#allocation3], 2
        // Predicated region
        $region53: #{tpu_custom_call.1} parent=35 // pred_check
          _
        $region54: #{tpu_custom_call.1} parent=35 // pred_check_branch
          %252 = sbr.rel target = $region56
        $region55: #{tpu_custom_call.1} parent=35 // pred_region
          %253 = sst [smem:[#allocation14]] [#allocation19]
          %254 = sst [smem:[#allocation15]] [#allocation18]
        $region56: #{tpu_custom_call.1} parent=35 // pred_fallthru
          _
        %256 = shalt.err (0)
        %s258 = sshll.u32 %s249, 4
        %s259 = int_to_ptr.vmem [resolvable:$true] %s258
        %261 = dma.hbm_to_vmem [thread:$0]  %s248, 16, %s259, %s250
        %s262 = sadd.s32 %s213, 3
        %s263 = sld [smem:[#allocation5 + %s262]]
        %s264 = smul.addr %s263, 16
        %s265 = scalar_lea.hbm %s1, %s264
        %s266 = scalar_lea.vmem [#allocation2], 3
        %s267 = scalar_lea.sflag [#allocation3], 3
        // Predicated region
        $region57: #{tpu_custom_call.1} parent=35 // pred_check
          _
        $region58: #{tpu_custom_call.1} parent=35 // pred_check_branch
          %269 = sbr.rel target = $region60
        $region59: #{tpu_custom_call.1} parent=35 // pred_region
          %270 = sst [smem:[#allocation14]] [#allocation21]
          %271 = sst [smem:[#allocation15]] [#allocation20]
        $region60: #{tpu_custom_call.1} parent=35 // pred_fallthru
          _
        %273 = shalt.err (0)
        %s275 = sshll.u32 %s266, 4
        %s276 = int_to_ptr.vmem [resolvable:$true] %s275
        %278 = dma.hbm_to_vmem [thread:$0]  %s265, 16, %s276, %s267
        %s279 = sadd.s32 %s213, 4
        %s280 = sld [smem:[#allocation5 + %s279]]
        %s281 = smul.addr %s280, 16
        %s282 = scalar_lea.hbm %s1, %s281
        %s283 = scalar_lea.vmem [#allocation2], 4
        %s284 = scalar_lea.sflag [#allocation3], 4
        // Predicated region
        $region61: #{tpu_custom_call.1} parent=35 // pred_check
          _
        $region62: #{tpu_custom_call.1} parent=35 // pred_check_branch
          %286 = sbr.rel target = $region64
        $region63: #{tpu_custom_call.1} parent=35 // pred_region
          %287 = sst [smem:[#allocation14]] [#allocation23]
          %288 = sst [smem:[#allocation15]] [#allocation22]
        $region64: #{tpu_custom_call.1} parent=35 // pred_fallthru
          _
        %290 = shalt.err (0)
        %s292 = sshll.u32 %s283, 4
        %s293 = int_to_ptr.vmem [resolvable:$true] %s292
        %295 = dma.hbm_to_vmem [thread:$0]  %s282, 16, %s293, %s284
        %s296 = sadd.s32 %s213, 5
        %s297 = sld [smem:[#allocation5 + %s296]]
        %s298 = smul.addr %s297, 16
        %s299 = scalar_lea.hbm %s1, %s298
        %s300 = scalar_lea.vmem [#allocation2], 5
        %s301 = scalar_lea.sflag [#allocation3], 5
        // Predicated region
        $region65: #{tpu_custom_call.1} parent=35 // pred_check
          _
        $region66: #{tpu_custom_call.1} parent=35 // pred_check_branch
          %303 = sbr.rel target = $region68
        $region67: #{tpu_custom_call.1} parent=35 // pred_region
          %304 = sst [smem:[#allocation14]] [#allocation25]
          %305 = sst [smem:[#allocation15]] [#allocation24]
        $region68: #{tpu_custom_call.1} parent=35 // pred_fallthru
          _
        %307 = shalt.err (0)
        %s309 = sshll.u32 %s300, 4
        %s310 = int_to_ptr.vmem [resolvable:$true] %s309
        %312 = dma.hbm_to_vmem [thread:$0]  %s299, 16, %s310, %s301
        %s313 = sadd.s32 %s213, 6
        %s314 = sld [smem:[#allocation5 + %s313]]
        %s315 = smul.addr %s314, 16
        %s316 = scalar_lea.hbm %s1, %s315
        %s317 = scalar_lea.vmem [#allocation2], 6
        %s318 = scalar_lea.sflag [#allocation3], 6
        // Predicated region
        $region69: #{tpu_custom_call.1} parent=35 // pred_check
          _
        $region70: #{tpu_custom_call.1} parent=35 // pred_check_branch
          %320 = sbr.rel target = $region72
        $region71: #{tpu_custom_call.1} parent=35 // pred_region
          %321 = sst [smem:[#allocation14]] [#allocation27]
          %322 = sst [smem:[#allocation15]] [#allocation26]
        $region72: #{tpu_custom_call.1} parent=35 // pred_fallthru
          _
        %324 = shalt.err (0)
        %s326 = sshll.u32 %s317, 4
        %s327 = int_to_ptr.vmem [resolvable:$true] %s326
        %329 = dma.hbm_to_vmem [thread:$0]  %s316, 16, %s327, %s318
        %s330 = sadd.s32 %s213, 7
        %s331 = sld [smem:[#allocation5 + %s330]]
        %s332 = smul.addr %s331, 16
        %s333 = scalar_lea.hbm %s1, %s332
        %s334 = scalar_lea.vmem [#allocation2], 7
        %s335 = scalar_lea.sflag [#allocation3], 7
        // Predicated region
        $region73: #{tpu_custom_call.1} parent=35 // pred_check
          _
        $region74: #{tpu_custom_call.1} parent=35 // pred_check_branch
          %337 = sbr.rel target = $region76
        $region75: #{tpu_custom_call.1} parent=35 // pred_region
          %338 = sst [smem:[#allocation14]] [#allocation29]
          %339 = sst [smem:[#allocation15]] [#allocation28]
        $region76: #{tpu_custom_call.1} parent=35 // pred_fallthru
          _
        %341 = shalt.err (0)
        %s343 = sshll.u32 %s334, 4
        %s344 = int_to_ptr.vmem [resolvable:$true] %s343
        %346 = dma.hbm_to_vmem [thread:$0]  %s333, 16, %s344, %s335
        %s347 = smul.u32 1, 1
        %s348 = sshll.u32 %s347, 4
        %349 = dma.done [#allocation3], %s348
        %s350 = sshll.u32 %s347, 4
        %351 = dma.done %s233, %s350
        %s352 = sshll.u32 %s347, 4
        %353 = dma.done %s250, %s352
        %s354 = sshll.u32 %s347, 4
        %355 = dma.done %s267, %s354
        %s356 = sshll.u32 %s347, 4
        %357 = dma.done %s284, %s356
        %s358 = sshll.u32 %s347, 4
        %359 = dma.done %s301, %s358
        %s360 = sshll.u32 %s347, 4
        %361 = dma.done %s318, %s360
        %s362 = sshll.u32 %s347, 4
        %363 = dma.done %s335, %s362
        %v364 = vld [vmem:[#allocation2] sm:$0xff]
        %v365 = vpack.c.bf16 %v364, %v364
        %v366 = vld [vmem:[#allocation6] sm:$0xf]
        %v367 = vld [vmem:[#allocation6 + $0x4] sm:$0xf]
        %v368 = vld [vmem:[#allocation6 + $0x8] sm:$0xf]
        %v369 = vld [vmem:[#allocation6 + $0xc] sm:$0xf]
        %v370 = vld [vmem:[#allocation6 + $0x10] sm:$0xf]
        %v371 = vld [vmem:[#allocation6 + $0x14] sm:$0xf]
        %v372 = vld [vmem:[#allocation6 + $0x18] sm:$0xf]
        %v373 = vld [vmem:[#allocation6 + $0x1c] sm:$0xf]
        %v374 = vld [vmem:[#allocation6 + $0x20] sm:$0xf]
        %v375 = vld [vmem:[#allocation6 + $0x24] sm:$0xf]
        %v376 = vld [vmem:[#allocation6 + $0x28] sm:$0xf]
        %v377 = vld [vmem:[#allocation6 + $0x2c] sm:$0xf]
        %v378 = vld [vmem:[#allocation6 + $0x30] sm:$0xf]
        %v379 = vld [vmem:[#allocation6 + $0x34] sm:$0xf]
        %v380 = vld [vmem:[#allocation6 + $0x38] sm:$0xf]
        %v381 = vld [vmem:[#allocation6 + $0x3c] sm:$0xf]
        %v382 = vld [vmem:[%s3] sm:$0x1]
        %v384 = vlaneseq
        %v385 = vshrl.u32 %v384, 7
        %v386 = vsub.s32 0, %v385
        %v387 = vrot.slane %v382, %v386
        %v405 = vunpack.c.l.b16 %v366
        %v406 = vunpack.c.l.b16 %v367
        %v407 = vunpack.c.l.b16 %v368
        %v408 = vunpack.c.l.b16 %v369
        %v409 = vunpack.c.l.b16 %v370
        %v410 = vunpack.c.l.b16 %v371
        %v411 = vunpack.c.l.b16 %v372
        %v412 = vunpack.c.l.b16 %v373
        %v413 = vunpack.c.l.b16 %v374
        %v414 = vunpack.c.l.b16 %v375
        %v415 = vunpack.c.l.b16 %v376
        %v416 = vunpack.c.l.b16 %v377
        %v417 = vunpack.c.l.b16 %v378
        %v418 = vunpack.c.l.b16 %v379
        %v419 = vunpack.c.l.b16 %v380
        %v420 = vunpack.c.l.b16 %v381
        %v421 = vpack.c.b16 %v406, %v405
        %v422 = vpack.c.b16 %v408, %v407
        %v423 = vpack.c.b16 %v410, %v409
        %v424 = vpack.c.b16 %v412, %v411
        %v425 = vpack.c.b16 %v414, %v413
        %v426 = vpack.c.b16 %v416, %v415
        %v427 = vpack.c.b16 %v418, %v417
        %v428 = vpack.c.b16 %v420, %v419
        %437 = vmatprep.subr.bf16.mxu0 0
        %438 = vmatpush1.bf16.msra.mxu0 %v421
        %439 = vmatprep.subr.bf16.mxu0 0
        %440 = vmatpush1.bf16.msra.mxu0 %v422
        %441 = vmatprep.subr.bf16.mxu0 0
        %442 = vmatpush1.bf16.msra.mxu0 %v423
        %443 = vmatprep.subr.bf16.mxu0 0
        %444 = vmatpush1.bf16.msra.mxu0 %v424
        %445 = vmatprep.subr.bf16.mxu0 0
        %446 = vmatpush1.bf16.msra.mxu0 %v425
        %447 = vmatprep.subr.bf16.mxu0 0
        %448 = vmatpush1.bf16.msra.mxu0 %v426
        %449 = vmatprep.subr.bf16.mxu0 0
        %450 = vmatpush1.bf16.msra.mxu0 %v427
        %451 = vmatprep.subr.bf16.mxu0 0
        %452 = vmatpush1.bf16.msra.mxu0 %v428
        %453 = vmatprep.subr.bf16.mxu0 0
        %454 = vmatpush1.bf16.msra.mxu0 0
        %455 = vmatprep.subr.bf16.mxu0 0
        %456 = vmatpush1.bf16.msra.mxu0 0
        %457 = vmatprep.subr.bf16.mxu0 0
        %458 = vmatpush1.bf16.msra.mxu0 0
        %459 = vmatprep.subr.bf16.mxu0 0
        %460 = vmatpush1.bf16.msra.mxu0 0
        %461 = vmatprep.subr.bf16.mxu0 0
        %462 = vmatpush1.bf16.msra.mxu0 0
        %463 = vmatprep.subr.bf16.mxu0 0
        %464 = vmatpush1.bf16.msra.mxu0 0
        %465 = vmatprep.subr.bf16.mxu0 0
        %466 = vmatpush1.bf16.msra.mxu0 0
        %467 = vmatprep.subr.bf16.mxu0 0
        %468 = vmatpush1.bf16.msra.mxu0 0
        %469 = vmatprep.mubr.bf16.mxu0 0
        %470 = vmatmul.mubr.bf16.gmra.mrb[0].mxu0 %v365
        %v471 = vpop.f32.mrb[0].mxu0
        %v472 = vadd.f32 %v387, %v471
        %v473 = vpop.f32.mrb[0].mxu0
        %v474 = vpop.f32.mrb[0].mxu0
        %v475 = vpop.f32.mrb[0].mxu0
        %476 = vdwg.mxu0
        %v477 = vxor.u32 %v472, 2147483648
        %v478 = vmul.f32 %v477, 1.442695
        %v479 = vpow.pop %v478
        %v480 = vadd.f32 %v479, 1.0
        %v481 = vrcp.pop %v480
        %v482 = vmul.f32 1.0, %v481
        %v483 = vpack.c.bf16 %v482, %v482
        %v484 = vld [vmem:[#allocation9] sm:$0xf]
        %v485 = vld [vmem:[#allocation9 + $0x4] sm:$0xf]
        %v486 = vld [vmem:[#allocation9 + $0x8] sm:$0xf]
        %v487 = vld [vmem:[#allocation9 + $0xc] sm:$0xf]
        %v488 = vld [vmem:[#allocation9 + $0x10] sm:$0xf]
        %v489 = vld [vmem:[#allocation9 + $0x14] sm:$0xf]
        %v490 = vld [vmem:[#allocation9 + $0x18] sm:$0xf]
        %v491 = vld [vmem:[#allocation9 + $0x1c] sm:$0xf]
        %v492 = vld [vmem:[#allocation9 + $0x20] sm:$0xf]
        %v493 = vld [vmem:[#allocation9 + $0x24] sm:$0xf]
        %v494 = vld [vmem:[#allocation9 + $0x28] sm:$0xf]
        %v495 = vld [vmem:[#allocation9 + $0x2c] sm:$0xf]
        %v496 = vld [vmem:[#allocation9 + $0x30] sm:$0xf]
        %v497 = vld [vmem:[#allocation9 + $0x34] sm:$0xf]
        %v498 = vld [vmem:[#allocation9 + $0x38] sm:$0xf]
        %v499 = vld [vmem:[#allocation9 + $0x3c] sm:$0xf]
        %v500 = vld [vmem:[%s5] sm:$0x1]
        %v502 = vlaneseq
        %v503 = vshrl.u32 %v502, 7
        %v504 = vsub.s32 0, %v503
        %v505 = vrot.slane %v500, %v504
        %v523 = vunpack.c.l.b16 %v484
        %v524 = vunpack.c.l.b16 %v485
        %v525 = vunpack.c.l.b16 %v486
        %v526 = vunpack.c.l.b16 %v487
        %v527 = vunpack.c.l.b16 %v488
        %v528 = vunpack.c.l.b16 %v489
        %v529 = vunpack.c.l.b16 %v490
        %v530 = vunpack.c.l.b16 %v491
        %v531 = vunpack.c.l.b16 %v492
        %v532 = vunpack.c.l.b16 %v493
        %v533 = vunpack.c.l.b16 %v494
        %v534 = vunpack.c.l.b16 %v495
        %v535 = vunpack.c.l.b16 %v496
        %v536 = vunpack.c.l.b16 %v497
        %v537 = vunpack.c.l.b16 %v498
        %v538 = vunpack.c.l.b16 %v499
        %v539 = vpack.c.b16 %v524, %v523
        %v540 = vpack.c.b16 %v526, %v525
        %v541 = vpack.c.b16 %v528, %v527
        %v542 = vpack.c.b16 %v530, %v529
        %v543 = vpack.c.b16 %v532, %v531
        %v544 = vpack.c.b16 %v534, %v533
        %v545 = vpack.c.b16 %v536, %v535
        %v546 = vpack.c.b16 %v538, %v537
        %555 = vmatprep.subr.bf16.mxu0 0
        %556 = vmatpush1.bf16.msra.mxu0 %v539
        %557 = vmatprep.subr.bf16.mxu0 0
        %558 = vmatpush1.bf16.msra.mxu0 %v540
        %559 = vmatprep.subr.bf16.mxu0 0
        %560 = vmatpush1.bf16.msra.mxu0 %v541
        %561 = vmatprep.subr.bf16.mxu0 0
        %562 = vmatpush1.bf16.msra.mxu0 %v542
        %563 = vmatprep.subr.bf16.mxu0 0
        %564 = vmatpush1.bf16.msra.mxu0 %v543
        %565 = vmatprep.subr.bf16.mxu0 0
        %566 = vmatpush1.bf16.msra.mxu0 %v544
        %567 = vmatprep.subr.bf16.mxu0 0
        %568 = vmatpush1.bf16.msra.mxu0 %v545
        %569 = vmatprep.subr.bf16.mxu0 0
        %570 = vmatpush1.bf16.msra.mxu0 %v546
        %571 = vmatprep.subr.bf16.mxu0 0
        %572 = vmatpush1.bf16.msra.mxu0 0
        %573 = vmatprep.subr.bf16.mxu0 0
        %574 = vmatpush1.bf16.msra.mxu0 0
        %575 = vmatprep.subr.bf16.mxu0 0
        %576 = vmatpush1.bf16.msra.mxu0 0
        %577 = vmatprep.subr.bf16.mxu0 0
        %578 = vmatpush1.bf16.msra.mxu0 0
        %579 = vmatprep.subr.bf16.mxu0 0
        %580 = vmatpush1.bf16.msra.mxu0 0
        %581 = vmatprep.subr.bf16.mxu0 0
        %582 = vmatpush1.bf16.msra.mxu0 0
        %583 = vmatprep.subr.bf16.mxu0 0
        %584 = vmatpush1.bf16.msra.mxu0 0
        %585 = vmatprep.subr.bf16.mxu0 0
        %586 = vmatpush1.bf16.msra.mxu0 0
        %587 = vmatprep.mubr.bf16.mxu0 0
        %588 = vmatmul.mubr.bf16.gmra.mrb[0].mxu0 %v483
        %v589 = vpop.f32.mrb[0].mxu0
        %v590 = vadd.f32 %v505, %v589
        %v591 = vpop.f32.mrb[0].mxu0
        %v592 = vpop.f32.mrb[0].mxu0
        %v593 = vpop.f32.mrb[0].mxu0
        %594 = vdwg.mxu0
        %595 = vmax.xlane.f32.xlu0 %v590
        %v596 = vpop.xlane.xlu0 %595
        %v597 = vsub.f32 %v590, %v596
        %v598 = vmul.f32 %v597, 1.442695
        %v599 = vpow.pop %v598
        %600 = vadd.xlane.f32.xlu0 %v599
        %v601 = vpop.xlane.xlu0 %600
        %v602 = vlog2.pop %v601
        %v603 = vmul.f32 %v602, 0.6931472
        %v604 = vsub.f32 %v597, %v603
        %605 = vst [vmem:[%s211] sm:$0xff] %v604
        %s606 = sand.u32 %s118, 1
        %s607 = scalar_lea.sflag [#allocation8], %s606
        %s608 = sand.u32 %s118, 1
        %s609 = smul.addr %s608, 8
        %s610 = scalar_lea.vmem [#allocation11], %s609
        // Predicated region
        $region77: #{tpu_custom_call.1} parent=35 // pred_check
          %p611 = pneg %p128
        $region78: #{tpu_custom_call.1} parent=35 // pred_check_branch
          %613 = sbr.rel (%p611) target = $region80
        $region79: #{tpu_custom_call.1} parent=35 // pred_region
          %s615 = ssub.s32 128, 128
          %616 = vsyncadd %s607, %s615
          %s617 = smul.addr %s26, 128
          %s618 = scalar_lea.hbm %s6, %s617
          %s620 = sshll.u32 %s610, 4
          %s621 = int_to_ptr.vmem [resolvable:$true] %s620
          %623 = dma.vmem_to_hbm [thread:$0]  %s621, 128, %s618, %s607
        $region80: #{tpu_custom_call.1} parent=35 // pred_fallthru
          _
      $region36: #{tpu_custom_call.1} parent=5 // pred_fallthru
        _
      %p624 = scmp.le.s32.totalorder 2, %s21
      // Predicated region
      $region81: #{tpu_custom_call.1} parent=5 // pred_check
        %p625 = pneg %p624
      $region82: #{tpu_custom_call.1} parent=5 // pred_check_branch
        %627 = sbr.rel (%p625) target = $region84
      $region83: #{tpu_custom_call.1} parent=5 // pred_region
        %s628 = ssub.s32 %s21, 2
        // Predicated region
        $region85: #{tpu_custom_call.1} parent=83 // pred_check
          %p629 = pneg %p134
        $region86: #{tpu_custom_call.1} parent=83 // pred_check_branch
          %631 = sbr.rel (%p629) target = $region88
        $region87: #{tpu_custom_call.1} parent=83 // pred_region
          %s632 = sand.u32 %s119, 1
          %s633 = scalar_lea.sflag [#allocation8], %s632
          %s634 = sand.u32 %s119, 1
          %s635 = smul.addr %s634, 8
          %s636 = scalar_lea.vmem [#allocation11], %s635
          %637 = dma.done %s633, 128
        $region88: #{tpu_custom_call.1} parent=83 // pred_fallthru
          _
      $region84: #{tpu_custom_call.1} parent=5 // pred_fallthru
        _
    $region6: #{tpu_custom_call.1} parent=1 // loop_footer
      %s25 = sadd.s32 1, %s21
    $region7: #{tpu_custom_call.1} parent=1 // loop_footer_branch
      %20 = sbr.rel target = $region3
    $region8: #{tpu_custom_call.1} parent=1 // loop_exit
      _
    %638 = vsyncpa [#allocation7], 1
    %s639 = scalar_lea.sflag [#allocation7], 1
    %640 = vsyncpa %s639, 1
    %641 = vsyncpa [#allocation10], 1
    %642 = vsyncpa [#allocation8], 1
    %s643 = scalar_lea.sflag [#allocation8], 1
    %644 = vsyncpa %s643, 1
  %645 = vsyncmov [#allocation3]
  %s646 = vpop.sfrf %645
  %p647 = scmp.eq.s32.totalorder %s646, 0
  %p648 = pneg %p647
  %650 = shalt.err (%p648)
  %s651 = scalar_lea.sflag [#allocation3], 1
  %652 = vsyncmov %s651
  %s653 = vpop.sfrf %652
  %p654 = scmp.eq.s32.totalorder %s653, 0
  %p655 = pneg %p654
  %657 = shalt.err (%p655)
  %s658 = scalar_lea.sflag [#allocation3], 2
  %659 = vsyncmov %s658
  %s660 = vpop.sfrf %659
  %p661 = scmp.eq.s32.totalorder %s660, 0
  %p662 = pneg %p661
  %664 = shalt.err (%p662)
  %s665 = scalar_lea.sflag [#allocation3], 3
  %666 = vsyncmov %s665
  %s667 = vpop.sfrf %666
  %p668 = scmp.eq.s32.totalorder %s667, 0
  %p669 = pneg %p668
  %671 = shalt.err (%p669)
  %s672 = scalar_lea.sflag [#allocation3], 4
  %673 = vsyncmov %s672
  %s674 = vpop.sfrf %673
  %p675 = scmp.eq.s32.totalorder %s674, 0
  %p676 = pneg %p675
  %678 = shalt.err (%p676)
  %s679 = scalar_lea.sflag [#allocation3], 5
  %680 = vsyncmov %s679
  %s681 = vpop.sfrf %680
  %p682 = scmp.eq.s32.totalorder %s681, 0
  %p683 = pneg %p682
  %685 = shalt.err (%p683)
  %s686 = scalar_lea.sflag [#allocation3], 6
  %687 = vsyncmov %s686
  %s688 = vpop.sfrf %687
  %p689 = scmp.eq.s32.totalorder %s688, 0
  %p690 = pneg %p689
  %692 = shalt.err (%p690)
  %s693 = scalar_lea.sflag [#allocation3], 7
  %694 = vsyncmov %s693
  %s695 = vpop.sfrf %694
  %p696 = scmp.eq.s32.totalorder %s695, 0
  %p697 = pneg %p696
  %699 = shalt.err (%p697)

</llo_original>
